<compile_context>
chip_gen: v6e
topology: v6e:2x2x1
jax: 0.10.0
libtpu: 0.0.40
codegen_flags: <defaults>
</compile_context>

<pallas_src>
import functools

import jax
import jax.numpy as jnp
from jax.experimental import pallas as pl
from jax.experimental.pallas import tpu as pltpu

D_IN, D_HID, D_OUT = 512, 256, 128


def _round_up(n, m):
    return ((n + m - 1) // m) * m


def _projector_kernel(x_ref, w1_ref, b1_ref, w2_ref, b2_ref, o_ref):
    # Linear 1 (MXU, f32 accumulate) + bias (f32) + ReLU.
    h = jnp.dot(x_ref[...], w1_ref[...], preferred_element_type=jnp.float32)
    h = jnp.maximum(h + b1_ref[...], 0.0)
    # Linear 2: feed the MXU in the weights' dtype (bf16 when the fast path is
    # enabled), accumulate in f32, add bias in f32, cast once at the store.
    o = jnp.dot(h.astype(w2_ref.dtype), w2_ref[...],
                preferred_element_type=jnp.float32)
    o_ref[...] = (o + b2_ref[...]).astype(o_ref.dtype)


@functools.partial(jax.jit, static_argnames=("block_b", "compute_dtype"))
def projector_forward(x, w1, b1, w2, b2, *, block_b=1024, compute_dtype=None):
    """x: (B, 512) -> (B, 128).

    Weights stored transposed vs. PyTorch: w1 (512, 256), b1 (1, 256),
    w2 (256, 128), b2 (1, 128).  `compute_dtype=jnp.bfloat16` enables the
    reduced-precision MXU-input path (f32 accumulation is kept); biases stay
    f32 and the output keeps x's original dtype.
    """
    B = x.shape[0]
    out_dtype = x.dtype

    if compute_dtype is not None:
        x = x.astype(compute_dtype)
        w1 = w1.astype(compute_dtype)
        w2 = w2.astype(compute_dtype)
    b1 = b1.astype(jnp.float32)
    b2 = b2.astype(jnp.float32)

    # --- choose the batch tile ------------------------------------------------
    # Tile must be a multiple of 8 (f32 sublane); don't make it larger than the
    # (padded) batch.  Prefer >=2 grid steps so the "parallel" axis can shard
    # across both TensorCores on v7x whenever the batch is big enough.
    blk = min(block_b, _round_up(B, 8))
    blk = max(8, _round_up(blk, 8))
    if B > 8 and _round_up(B, blk) // blk < 2:
        blk = max(8, _round_up(-(-B // 2), 8))
    B_pad = _round_up(B, blk)
    if B_pad != B:
        x = jnp.pad(x, ((0, B_pad - B), (0, 0)))

    grid = (B_pad // blk,)

    out = pl.pallas_call(
        _projector_kernel,
        out_shape=jax.ShapeDtypeStruct((B_pad, D_OUT), out_dtype),
        grid_spec=pltpu.PrefetchScalarGridSpec(
            num_scalar_prefetch=0,
            grid=grid,
            in_specs=[
                pl.BlockSpec((blk, D_IN), lambda i: (i, 0)),    # x tile (streamed)
                pl.BlockSpec((D_IN, D_HID), lambda i: (0, 0)),  # W1 (resident)
                pl.BlockSpec((1, D_HID), lambda i: (0, 0)),     # b1 (resident)
                pl.BlockSpec((D_HID, D_OUT), lambda i: (0, 0)), # W2 (resident)
                pl.BlockSpec((1, D_OUT), lambda i: (0, 0)),     # b2 (resident)
            ],
            out_specs=pl.BlockSpec((blk, D_OUT), lambda i: (i, 0)),
        ),
        compiler_params=pltpu.CompilerParams(
            dimension_semantics=("parallel",),
            vmem_limit_bytes=32 << 20,
        ),
    )(x, w1, b1, w2, b2)

    return out[:B] if B_pad != B else out


def init_params(key, dtype=jnp.float32):
    """Deterministic init matching nn.Linear shapes (stored transposed)."""
    k1, k2, k3, k4 = jax.random.split(key, 4)
    # PyTorch default init: U(-1/sqrt(fan_in), 1/sqrt(fan_in)).
    lim1 = 1.0 / jnp.sqrt(jnp.array(D_IN, dtype))
    lim2 = 1.0 / jnp.sqrt(jnp.array(D_HID, dtype))
    w1 = jax.random.uniform(k1, (D_IN, D_HID), dtype, -lim1, lim1)
    b1 = jax.random.uniform(k2, (1, D_HID), dtype, -lim1, lim1)
    w2 = jax.random.uniform(k3, (D_HID, D_OUT), dtype, -lim2, lim2)
    b2 = jax.random.uniform(k4, (1, D_OUT), dtype, -lim2, lim2)
    return w1, b1, w2, b2


def reference_forward(x, w1, b1, w2, b2):
    h = jnp.maximum(x @ w1 + b1, 0.0)
    return h @ w2 + b2


if __name__ == "__main__":
    key = jax.random.PRNGKey(0)
    kx, kx2, kp = jax.random.split(key, 3)
    w1, b1, w2, b2 = init_params(kp)

    # Small demo batch (single tile, exact f32 path).
    B = 8
    x = jax.random.normal(kx, (B, D_IN), jnp.float32)
    out = jax.block_until_ready(projector_forward(x, w1, b1, w2, b2))
    ref = reference_forward(x, w1, b1, w2, b2)
    assert out.shape == (B, D_OUT)
    assert jnp.allclose(out, ref, atol=1e-4, rtol=1e-4), "f32 mismatch vs reference"

    # Non-divisible batch exercises the pad + multi-step-grid path.
    B2 = 300
    x2 = jax.random.normal(kx2, (B2, D_IN), jnp.float32)
    out2 = jax.block_until_ready(projector_forward(x2, w1, b1, w2, b2))
    ref2 = reference_forward(x2, w1, b1, w2, b2)
    assert out2.shape == (B2, D_OUT)
    assert jnp.allclose(out2, ref2, atol=1e-4, rtol=1e-4), "padded-batch mismatch"

    # Optional bf16 fast path (f32 accumulation) — looser tolerance.
    out3 = jax.block_until_ready(
        projector_forward(x2, w1, b1, w2, b2, compute_dtype=jnp.bfloat16))
    assert jnp.allclose(out3, ref2, atol=5e-2, rtol=5e-2), "bf16 path mismatch"

    print("KERNEL_OK")
</pallas_src>

<mosaic_0001>
module attributes {stable_mosaic.version = 11 : i64} {
  func.func @_projector_kernel(%arg0: i32, %arg1: memref<8x512xf32, #tpu.memory_space<vmem>>, %arg2: memref<512x256xf32, #tpu.memory_space<vmem>>, %arg3: memref<1x256xf32, #tpu.memory_space<vmem>>, %arg4: memref<256x128xf32, #tpu.memory_space<vmem>>, %arg5: memref<1x128xf32, #tpu.memory_space<vmem>>, %arg6: memref<8x128xf32, #tpu.memory_space<vmem>>) attributes {dimension_semantics = [#tpu.dimension_semantics<parallel>], iteration_bounds = array<i64: 1>, scalar_prefetch = 0 : i64, scratch_operands = 0 : i64, tpu.core_type = #tpu.core_type<tc>, window_params = [{transform_indices = @transform_0, window_bounds = array<i64: 8, 512>}, {pipeline_mode = #tpu.pipeline_mode<synchronous>, transform_indices = @transform_1, window_bounds = array<i64: 512, 256>}, {pipeline_mode = #tpu.pipeline_mode<synchronous>, transform_indices = @transform_2, window_bounds = array<i64: 1, 256>}, {pipeline_mode = #tpu.pipeline_mode<synchronous>, transform_indices = @transform_3, window_bounds = array<i64: 256, 128>}, {pipeline_mode = #tpu.pipeline_mode<synchronous>, transform_indices = @transform_4, window_bounds = array<i64: 1, 128>}, {transform_indices = @transform_5, window_bounds = array<i64: 8, 128>}]} {
    %c0 = arith.constant 0 : index
    %c0_0 = arith.constant 0 : index
    %0 = vector.load %arg1[%c0, %c0_0] : memref<8x512xf32, #tpu.memory_space<vmem>>, vector<8x512xf32>
    %c0_1 = arith.constant 0 : index
    %c0_2 = arith.constant 0 : index
    %1 = vector.load %arg2[%c0_1, %c0_2] : memref<512x256xf32, #tpu.memory_space<vmem>>, vector<512x256xf32>
    %cst = arith.constant dense<0.000000e+00> : vector<8x256xf32>
    %2 = tpu.matmul %0, %1, %cst {dimension_numbers = #tpu.dot_dimension_numbers<[1], [0], [0], [1], [0, 0, 1, 1], [], []>} : vector<8x512xf32>, vector<512x256xf32>, vector<8x256xf32> -> vector<8x256xf32>
    %c0_3 = arith.constant 0 : index
    %c0_4 = arith.constant 0 : index
    %3 = vector.load %arg3[%c0_3, %c0_4] : memref<1x256xf32, #tpu.memory_space<vmem>>, vector<1x256xf32>
    %4 = vector.broadcast %3 : vector<1x256xf32> to vector<8x256xf32>
    %5 = arith.addf %2, %4 : vector<8x256xf32>
    %cst_5 = arith.constant 0.000000e+00 : f32
    %6 = vector.broadcast %cst_5 : f32 to vector<8x256xf32>
    %7 = arith.maximumf %5, %6 : vector<8x256xf32>
    %c0_6 = arith.constant 0 : index
    %c0_7 = arith.constant 0 : index
    %8 = vector.load %arg4[%c0_6, %c0_7] : memref<256x128xf32, #tpu.memory_space<vmem>>, vector<256x128xf32>
    %cst_8 = arith.constant dense<0.000000e+00> : vector<8x128xf32>
    %9 = tpu.matmul %7, %8, %cst_8 {dimension_numbers = #tpu.dot_dimension_numbers<[1], [0], [0], [1], [0, 0, 1, 1], [], []>} : vector<8x256xf32>, vector<256x128xf32>, vector<8x128xf32> -> vector<8x128xf32>
    %c0_9 = arith.constant 0 : index
    %c0_10 = arith.constant 0 : index
    %10 = vector.load %arg5[%c0_9, %c0_10] : memref<1x128xf32, #tpu.memory_space<vmem>>, vector<1x128xf32>
    %11 = vector.broadcast %10 : vector<1x128xf32> to vector<8x128xf32>
    %12 = arith.addf %9, %11 : vector<8x128xf32>
    %c0_11 = arith.constant 0 : index
    %c0_12 = arith.constant 0 : index
    %13 = vector.load %arg6[%c0_11, %c0_12] : memref<8x128xf32, #tpu.memory_space<vmem>>, vector<8x128xf32>
    tpu.vector_store %arg6[%c0_11, %c0_12], %12 {strides = array<i32>} : memref<8x128xf32, #tpu.memory_space<vmem>>, vector<8x128xf32>,
    return
  }
  func.func @transform_0(%arg0: i32) -> (i32, i32) {
    %c0_i32 = arith.constant 0 : i32
    %c0_i32_0 = arith.constant 0 : i32
    return %arg0, %c0_i32 : i32, i32
  }
  func.func @transform_1(%arg0: i32) -> (i32, i32) {
    %c0_i32 = arith.constant 0 : i32
    %c0_i32_0 = arith.constant 0 : i32
    %c0_i32_1 = arith.constant 0 : i32
    return %c0_i32, %c0_i32_0 : i32, i32
  }
  func.func @transform_2(%arg0: i32) -> (i32, i32) {
    %c0_i32 = arith.constant 0 : i32
    %c0_i32_0 = arith.constant 0 : i32
    %c0_i32_1 = arith.constant 0 : i32
    return %c0_i32, %c0_i32_0 : i32, i32
  }
  func.func @transform_3(%arg0: i32) -> (i32, i32) {
    %c0_i32 = arith.constant 0 : i32
    %c0_i32_0 = arith.constant 0 : i32
    %c0_i32_1 = arith.constant 0 : i32
    return %c0_i32, %c0_i32_0 : i32, i32
  }
  func.func @transform_4(%arg0: i32) -> (i32, i32) {
    %c0_i32 = arith.constant 0 : i32
    %c0_i32_0 = arith.constant 0 : i32
    %c0_i32_1 = arith.constant 0 : i32
    return %c0_i32, %c0_i32_0 : i32, i32
  }
  func.func @transform_5(%arg0: i32) -> (i32, i32) {
    %c0_i32 = arith.constant 0 : i32
    %c0_i32_0 = arith.constant 0 : i32
    return %arg0, %c0_i32 : i32, i32
  }
}

</mosaic_0001>

<llo_original>
// kernel: projector_forward.1
$region0: #{projector_forward.1}
  #allocation0 [shape = 'u32[]', space=smem, size = 0x4, offset = 0x4, fixed_abs, tag = 'smem constant byte address 0x4 - core index']
  #allocation1 [shape = 'u32[144,128]{1,0:T(1,128)}', space=vmem, size = 0x12000, scoped, tag = 'internal scratch']
  %s0 = inlined_call_operand.hbm [shape: f32[8,512], index: 0, kind: input, shape index: {}]
  %s1 = inlined_call_operand.hbm [shape: f32[512,256], index: 1, kind: input, shape index: {}]
  %s2 = inlined_call_operand.vmem [shape: f32[1,256], index: 2, kind: input, shape index: {}]
  %s3 = inlined_call_operand.hbm [shape: f32[256,128], index: 3, kind: input, shape index: {}]
  %s4 = inlined_call_operand.vmem [shape: f32[1,128], index: 4, kind: input, shape index: {}]
  %s5 = inlined_call_operand.hbm [shape: f32[8,128], index: 5, kind: output, shape index: {}]
  %s6 = sld [smem:[#allocation0]]
  $region42: #{projector_forward.1} parent=0
    _
  %s8 = ssub.s32 1, %s6
  %s9 = scalar_select 0, %s8, %s6
  $region1: #{projector_forward.1} parent=0
    #allocation2 [shape = 'u8[16384]{0}', space=vmem, size = 0x4000, scoped, tag = 'input window, operand 0, single buffered']
    #allocation3 [shape = 's32[1]{0}', space=sflag, size = 0x4, scoped, tag = 'scoped memory for projector_forward.1']
    #allocation4 [shape = 's32[1]{0}', space=sflag, size = 0x4, scoped, tag = 'scoped memory for projector_forward.1']
    #allocation5 [shape = 'u8[524288]{0}', space=vmem, size = 0x80000, scoped, tag = 'input window, operand 1, single buffered']
    #allocation6 [shape = 's32[1]{0}', space=sflag, size = 0x4, scoped, tag = 'scoped memory for projector_forward.1']
    #allocation7 [shape = 'u8[131072]{0}', space=vmem, size = 0x20000, scoped, tag = 'input window, operand 3, single buffered']
    #allocation8 [shape = 'u8[4096]{0}', space=vmem, size = 0x1000, scoped, tag = 'output window, operand 0, single buffered']
    %10 = vsyncpa [#allocation3], 0
    %11 = vsyncpa [#allocation6], 0
    %12 = vsyncpa [#allocation4], 0
    // Predicated region
    $region2: #{projector_forward.1} parent=1 // pred_check
      _
    $region3: #{projector_forward.1} parent=1 // pred_check_branch
      %14 = sbr.rel (0) target = $region5
    $region4: #{projector_forward.1} parent=1 // pred_region
      %s16 = ssub.s32 512, 512
      %17 = vsyncadd [#allocation3], %s16
      %s19 = sshll.u32 [#allocation2], 4
      %s20 = int_to_ptr.vmem [resolvable:$true] %s19
      %22 = dma.hbm_to_vmem [thread:$0]  %s0, 512, %s20, [#allocation3]
    $region5: #{projector_forward.1} parent=1 // pred_fallthru
      _
    // Predicated region
    $region6: #{projector_forward.1} parent=1 // pred_check
      _
    $region7: #{projector_forward.1} parent=1 // pred_check_branch
      %24 = sbr.rel (0) target = $region9
    $region8: #{projector_forward.1} parent=1 // pred_region
      %s26 = ssub.s32 16384, 16384
      %27 = vsyncadd [#allocation6], %s26
      %s28 = sshll.u32 [#allocation5], 4
      %s29 = int_to_ptr.vmem [resolvable:$true] %s28
      %34 = dma.hbm_to_vmem [thread:$0]  %s1, 16384, %s29, [#allocation6], 256, 256, 16
    $region9: #{projector_forward.1} parent=1 // pred_fallthru
      _
    // Predicated region
    $region10: #{projector_forward.1} parent=1 // pred_check
      _
    $region11: #{projector_forward.1} parent=1 // pred_check_branch
      %36 = sbr.rel (0) target = $region13
    $region12: #{projector_forward.1} parent=1 // pred_region
      _
    $region13: #{projector_forward.1} parent=1 // pred_fallthru
      _
    // Predicated region
    $region14: #{projector_forward.1} parent=1 // pred_check
      _
    $region15: #{projector_forward.1} parent=1 // pred_check_branch
      %38 = sbr.rel (0) target = $region17
    $region16: #{projector_forward.1} parent=1 // pred_region
      %s40 = ssub.s32 4096, 4096
      %41 = vsyncadd [#allocation6], %s40
      %s42 = sshll.u32 [#allocation7], 4
      %s43 = int_to_ptr.vmem [resolvable:$true] %s42
      %48 = dma.hbm_to_vmem [thread:$0]  %s3, 4096, %s43, [#allocation6], 128, 128, 8
    $region17: #{projector_forward.1} parent=1 // pred_fallthru
      _
    // Predicated region
    $region18: #{projector_forward.1} parent=1 // pred_check
      _
    $region19: #{projector_forward.1} parent=1 // pred_check_branch
      %50 = sbr.rel (0) target = $region21
    $region20: #{projector_forward.1} parent=1 // pred_region
      _
    $region21: #{projector_forward.1} parent=1 // pred_fallthru
      _
    // Predicated region
    $region22: #{projector_forward.1} parent=1 // pred_check
      _
    $region23: #{projector_forward.1} parent=1 // pred_check_branch
      %52 = sbr.rel (0) target = $region25
    $region24: #{projector_forward.1} parent=1 // pred_region
      %53 = dma.done [#allocation3], 512
    $region25: #{projector_forward.1} parent=1 // pred_fallthru
      _
    // Predicated region
    $region26: #{projector_forward.1} parent=1 // pred_check
      _
    $region27: #{projector_forward.1} parent=1 // pred_check_branch
      %55 = sbr.rel (0) target = $region29
    $region28: #{projector_forward.1} parent=1 // pred_region
      %56 = dma.done [#allocation6], 16384
    $region29: #{projector_forward.1} parent=1 // pred_fallthru
      _
    // Predicated region
    $region30: #{projector_forward.1} parent=1 // pred_check
      _
    $region31: #{projector_forward.1} parent=1 // pred_check_branch
      %58 = sbr.rel (0) target = $region33
    $region32: #{projector_forward.1} parent=1 // pred_region
      %59 = dma.done [#allocation6], 4096
    $region33: #{projector_forward.1} parent=1 // pred_fallthru
      _
    %v60 = vld [vmem:[#allocation2] sm:$0xff]
    %v61 = vld [vmem:[#allocation2 + $0x8] sm:$0xff]
    %v62 = vld [vmem:[#allocation2 + $0x10] sm:$0xff]
    %v63 = vld [vmem:[#allocation2 + $0x18] sm:$0xff]
    %v64 = vld [vmem:[#allocation5] sm:$0xff]
    %v65 = vld [vmem:[#allocation5 + $0x8] sm:$0xff]
    %v66 = vld [vmem:[#allocation5 + $0x10] sm:$0xff]
    %v67 = vld [vmem:[#allocation5 + $0x18] sm:$0xff]
    %v68 = vld [vmem:[#allocation5 + $0x20] sm:$0xff]
    %v69 = vld [vmem:[#allocation5 + $0x28] sm:$0xff]
    %v70 = vld [vmem:[#allocation5 + $0x30] sm:$0xff]
    %v71 = vld [vmem:[#allocation5 + $0x38] sm:$0xff]
    %v72 = vld [vmem:[#allocation5 + $0x40] sm:$0xff]
    %v73 = vld [vmem:[#allocation5 + $0x48] sm:$0xff]
    %v74 = vld [vmem:[#allocation5 + $0x50] sm:$0xff]
    %v75 = vld [vmem:[#allocation5 + $0x58] sm:$0xff]
    %v76 = vld [vmem:[#allocation5 + $0x60] sm:$0xff]
    %v77 = vld [vmem:[#allocation5 + $0x68] sm:$0xff]
    %v78 = vld [vmem:[#allocation5 + $0x70] sm:$0xff]
    %v79 = vld [vmem:[#allocation5 + $0x78] sm:$0xff]
    %v80 = vld [vmem:[#allocation5 + $0x80] sm:$0xff]
    %v81 = vld [vmem:[#allocation5 + $0x88] sm:$0xff]
    %v82 = vld [vmem:[#allocation5 + $0x90] sm:$0xff]
    %v83 = vld [vmem:[#allocation5 + $0x98] sm:$0xff]
    %v84 = vld [vmem:[#allocation5 + $0xa0] sm:$0xff]
    %v85 = vld [vmem:[#allocation5 + $0xa8] sm:$0xff]
    %v86 = vld [vmem:[#allocation5 + $0xb0] sm:$0xff]
    %v87 = vld [vmem:[#allocation5 + $0xb8] sm:$0xff]
    %v88 = vld [vmem:[#allocation5 + $0xc0] sm:$0xff]
    %v89 = vld [vmem:[#allocation5 + $0xc8] sm:$0xff]
    %v90 = vld [vmem:[#allocation5 + $0xd0] sm:$0xff]
    %v91 = vld [vmem:[#allocation5 + $0xd8] sm:$0xff]
    %v92 = vld [vmem:[#allocation5 + $0xe0] sm:$0xff]
    %v93 = vld [vmem:[#allocation5 + $0xe8] sm:$0xff]
    %v94 = vld [vmem:[#allocation5 + $0xf0] sm:$0xff]
    %v95 = vld [vmem:[#allocation5 + $0xf8] sm:$0xff]
    %v96 = vld [vmem:[#allocation5 + $0x100] sm:$0xff]
    %v97 = vld [vmem:[#allocation5 + $0x108] sm:$0xff]
    %v98 = vld [vmem:[#allocation5 + $0x110] sm:$0xff]
    %v99 = vld [vmem:[#allocation5 + $0x118] sm:$0xff]
    %v100 = vld [vmem:[#allocation5 + $0x120] sm:$0xff]
    %v101 = vld [vmem:[#allocation5 + $0x128] sm:$0xff]
    %v102 = vld [vmem:[#allocation5 + $0x130] sm:$0xff]
    %v103 = vld [vmem:[#allocation5 + $0x138] sm:$0xff]
    %v104 = vld [vmem:[#allocation5 + $0x140] sm:$0xff]
    %v105 = vld [vmem:[#allocation5 + $0x148] sm:$0xff]
    %v106 = vld [vmem:[#allocation5 + $0x150] sm:$0xff]
    %v107 = vld [vmem:[#allocation5 + $0x158] sm:$0xff]
    %v108 = vld [vmem:[#allocation5 + $0x160] sm:$0xff]
    %v109 = vld [vmem:[#allocation5 + $0x168] sm:$0xff]
    %v110 = vld [vmem:[#allocation5 + $0x170] sm:$0xff]
    %v111 = vld [vmem:[#allocation5 + $0x178] sm:$0xff]
    %v112 = vld [vmem:[#allocation5 + $0x180] sm:$0xff]
    %v113 = vld [vmem:[#allocation5 + $0x188] sm:$0xff]
    %v114 = vld [vmem:[#allocation5 + $0x190] sm:$0xff]
    %v115 = vld [vmem:[#allocation5 + $0x198] sm:$0xff]
    %v116 = vld [vmem:[#allocation5 + $0x1a0] sm:$0xff]
    %v117 = vld [vmem:[#allocation5 + $0x1a8] sm:$0xff]
    %v118 = vld [vmem:[#allocation5 + $0x1b0] sm:$0xff]
    %v119 = vld [vmem:[#allocation5 + $0x1b8] sm:$0xff]
    %v120 = vld [vmem:[#allocation5 + $0x1c0] sm:$0xff]
    %v121 = vld [vmem:[#allocation5 + $0x1c8] sm:$0xff]
    %v122 = vld [vmem:[#allocation5 + $0x1d0] sm:$0xff]
    %v123 = vld [vmem:[#allocation5 + $0x1d8] sm:$0xff]
    %v124 = vld [vmem:[#allocation5 + $0x1e0] sm:$0xff]
    %v125 = vld [vmem:[#allocation5 + $0x1e8] sm:$0xff]
    %v126 = vld [vmem:[#allocation5 + $0x1f0] sm:$0xff]
    %v127 = vld [vmem:[#allocation5 + $0x1f8] sm:$0xff]
    %v128 = vld [vmem:[#allocation5 + $0x200] sm:$0xff]
    %v129 = vld [vmem:[#allocation5 + $0x208] sm:$0xff]
    %v130 = vld [vmem:[#allocation5 + $0x210] sm:$0xff]
    %v131 = vld [vmem:[#allocation5 + $0x218] sm:$0xff]
    %v132 = vld [vmem:[#allocation5 + $0x220] sm:$0xff]
    %v133 = vld [vmem:[#allocation5 + $0x228] sm:$0xff]
    %v134 = vld [vmem:[#allocation5 + $0x230] sm:$0xff]
    %v135 = vld [vmem:[#allocation5 + $0x238] sm:$0xff]
    %v136 = vld [vmem:[#allocation5 + $0x240] sm:$0xff]
    %v137 = vld [vmem:[#allocation5 + $0x248] sm:$0xff]
    %v138 = vld [vmem:[#allocation5 + $0x250] sm:$0xff]
    %v139 = vld [vmem:[#allocation5 + $0x258] sm:$0xff]
    %v140 = vld [vmem:[#allocation5 + $0x260] sm:$0xff]
    %v141 = vld [vmem:[#allocation5 + $0x268] sm:$0xff]
    %v142 = vld [vmem:[#allocation5 + $0x270] sm:$0xff]
    %v143 = vld [vmem:[#allocation5 + $0x278] sm:$0xff]
    %v144 = vld [vmem:[#allocation5 + $0x280] sm:$0xff]
    %v145 = vld [vmem:[#allocation5 + $0x288] sm:$0xff]
    %v146 = vld [vmem:[#allocation5 + $0x290] sm:$0xff]
    %v147 = vld [vmem:[#allocation5 + $0x298] sm:$0xff]
    %v148 = vld [vmem:[#allocation5 + $0x2a0] sm:$0xff]
    %v149 = vld [vmem:[#allocation5 + $0x2a8] sm:$0xff]
    %v150 = vld [vmem:[#allocation5 + $0x2b0] sm:$0xff]
    %v151 = vld [vmem:[#allocation5 + $0x2b8] sm:$0xff]
    %v152 = vld [vmem:[#allocation5 + $0x2c0] sm:$0xff]
    %v153 = vld [vmem:[#allocation5 + $0x2c8] sm:$0xff]
    %v154 = vld [vmem:[#allocation5 + $0x2d0] sm:$0xff]
    %v155 = vld [vmem:[#allocation5 + $0x2d8] sm:$0xff]
    %v156 = vld [vmem:[#allocation5 + $0x2e0] sm:$0xff]
    %v157 = vld [vmem:[#allocation5 + $0x2e8] sm:$0xff]
    %v158 = vld [vmem:[#allocation5 + $0x2f0] sm:$0xff]
    %v159 = vld [vmem:[#allocation5 + $0x2f8] sm:$0xff]
    %v160 = vld [vmem:[#allocation5 + $0x300] sm:$0xff]
    %v161 = vld [vmem:[#allocation5 + $0x308] sm:$0xff]
    %v162 = vld [vmem:[#allocation5 + $0x310] sm:$0xff]
    %v163 = vld [vmem:[#allocation5 + $0x318] sm:$0xff]
    %v164 = vld [vmem:[#allocation5 + $0x320] sm:$0xff]
    %v165 = vld [vmem:[#allocation5 + $0x328] sm:$0xff]
    %v166 = vld [vmem:[#allocation5 + $0x330] sm:$0xff]
    %v167 = vld [vmem:[#allocation5 + $0x338] sm:$0xff]
    %v168 = vld [vmem:[#allocation5 + $0x340] sm:$0xff]
    %v169 = vld [vmem:[#allocation5 + $0x348] sm:$0xff]
    %v170 = vld [vmem:[#allocation5 + $0x350] sm:$0xff]
    %v171 = vld [vmem:[#allocation5 + $0x358] sm:$0xff]
    %v172 = vld [vmem:[#allocation5 + $0x360] sm:$0xff]
    %v173 = vld [vmem:[#allocation5 + $0x368] sm:$0xff]
    %v174 = vld [vmem:[#allocation5 + $0x370] sm:$0xff]
    %v175 = vld [vmem:[#allocation5 + $0x378] sm:$0xff]
    %v176 = vld [vmem:[#allocation5 + $0x380] sm:$0xff]
    %v177 = vld [vmem:[#allocation5 + $0x388] sm:$0xff]
    %v178 = vld [vmem:[#allocation5 + $0x390] sm:$0xff]
    %v179 = vld [vmem:[#allocation5 + $0x398] sm:$0xff]
    %v180 = vld [vmem:[#allocation5 + $0x3a0] sm:$0xff]
    %v181 = vld [vmem:[#allocation5 + $0x3a8] sm:$0xff]
    %v182 = vld [vmem:[#allocation5 + $0x3b0] sm:$0xff]
    %v183 = vld [vmem:[#allocation5 + $0x3b8] sm:$0xff]
    %v184 = vld [vmem:[#allocation5 + $0x3c0] sm:$0xff]
    %v185 = vld [vmem:[#allocation5 + $0x3c8] sm:$0xff]
    %v186 = vld [vmem:[#allocation5 + $0x3d0] sm:$0xff]
    %v187 = vld [vmem:[#allocation5 + $0x3d8] sm:$0xff]
    %v188 = vld [vmem:[#allocation5 + $0x3e0] sm:$0xff]
    %v189 = vld [vmem:[#allocation5 + $0x3e8] sm:$0xff]
    %v190 = vld [vmem:[#allocation5 + $0x3f0] sm:$0xff]
    %v191 = vld [vmem:[#allocation5 + $0x3f8] sm:$0xff]
    %v192 = vld [vmem:[%s2] sm:$0x3]
    %v194 = vlaneseq
    %v195 = vshrl.u32 %v194, 7
    %v196 = vsub.s32 0, %v195
    %v197 = vrot.slane %v192, %v196
    %v198 = vlaneseq
    %v199 = vshrl.u32 %v198, 7
    %v200 = vsub.s32 1, %v199
    %v201 = vrot.slane %v192, %v200
    %204 = vmatprep.subr.mxu0 %v95
    %205 = vmatpush1.msra.mxu0 %v94
    %206 = vmatprep.subr.mxu0 %v93
    %207 = vmatpush1.msra.mxu0 %v92
    %208 = vmatprep.subr.mxu0 %v91
    %209 = vmatpush1.msra.mxu0 %v90
    %210 = vmatprep.subr.mxu0 %v89
    %211 = vmatpush1.msra.mxu0 %v88
    %212 = vmatprep.subr.mxu0 %v87
    %213 = vmatpush1.msra.mxu0 %v86
    %214 = vmatprep.subr.mxu0 %v85
    %215 = vmatpush1.msra.mxu0 %v84
    %216 = vmatprep.subr.mxu0 %v83
    %217 = vmatpush1.msra.mxu0 %v82
    %218 = vmatprep.subr.mxu0 %v81
    %219 = vmatpush1.msra.mxu0 %v80
    %220 = vmatprep.subr.mxu0 %v79
    %221 = vmatpush1.msra.mxu0 %v78
    %222 = vmatprep.subr.mxu0 %v77
    %223 = vmatpush1.msra.mxu0 %v76
    %224 = vmatprep.subr.mxu0 %v75
    %225 = vmatpush1.msra.mxu0 %v74
    %226 = vmatprep.subr.mxu0 %v73
    %227 = vmatpush1.msra.mxu0 %v72
    %228 = vmatprep.subr.mxu0 %v71
    %229 = vmatpush1.msra.mxu0 %v70
    %230 = vmatprep.subr.mxu0 %v69
    %231 = vmatpush1.msra.mxu0 %v68
    %232 = vmatprep.subr.mxu0 %v67
    %233 = vmatpush1.msra.mxu0 %v66
    %234 = vmatprep.subr.mxu0 %v65
    %235 = vmatpush1.msra.mxu0 %v64
    %236 = vmatprep.subr.mxu0 %v127
    %237 = vmatpush2.msra.mxu0 %v126
    %238 = vmatprep.subr.mxu0 %v125
    %239 = vmatpush2.msra.mxu0 %v124
    %240 = vmatprep.subr.mxu0 %v123
    %241 = vmatpush2.msra.mxu0 %v122
    %242 = vmatprep.subr.mxu0 %v121
    %243 = vmatpush2.msra.mxu0 %v120
    %244 = vmatprep.subr.mxu0 %v119
    %245 = vmatpush2.msra.mxu0 %v118
    %246 = vmatprep.subr.mxu0 %v117
    %247 = vmatpush2.msra.mxu0 %v116
    %248 = vmatprep.subr.mxu0 %v115
    %249 = vmatpush2.msra.mxu0 %v114
    %250 = vmatprep.subr.mxu0 %v113
    %251 = vmatpush2.msra.mxu0 %v112
    %252 = vmatprep.subr.mxu0 %v111
    %253 = vmatpush2.msra.mxu0 %v110
    %254 = vmatprep.subr.mxu0 %v109
    %255 = vmatpush2.msra.mxu0 %v108
    %256 = vmatprep.subr.mxu0 %v107
    %257 = vmatpush2.msra.mxu0 %v106
    %258 = vmatprep.subr.mxu0 %v105
    %259 = vmatpush2.msra.mxu0 %v104
    %260 = vmatprep.subr.mxu0 %v103
    %261 = vmatpush2.msra.mxu0 %v102
    %262 = vmatprep.subr.mxu0 %v101
    %263 = vmatpush2.msra.mxu0 %v100
    %264 = vmatprep.subr.mxu0 %v99
    %265 = vmatpush2.msra.mxu0 %v98
    %266 = vmatprep.subr.mxu0 %v97
    %267 = vmatpush2.msra.mxu0 %v96
    %268 = vmatprep.mubr.f32.mxu0 %v61
    %269 = vmatmul.mubr.f32.gmra.mxu0 %v60
    %v270 = vpop.f32.mrf.mxu0
    %v271 = vadd.f32 %v197, %v270
    %v272 = vpop.f32.mrf.mxu0
    %v273 = vadd.f32 %v201, %v272
    %274 = vdwg.mxu0
    %275 = vmatprep.subr.mxu0 %v159
    %276 = vmatpush1.msra.mxu0 %v158
    %277 = vmatprep.subr.mxu0 %v157
    %278 = vmatpush1.msra.mxu0 %v156
    %279 = vmatprep.subr.mxu0 %v155
    %280 = vmatpush1.msra.mxu0 %v154
    %281 = vmatprep.subr.mxu0 %v153
    %282 = vmatpush1.msra.mxu0 %v152
    %283 = vmatprep.subr.mxu0 %v151
    %284 = vmatpush1.msra.mxu0 %v150
    %285 = vmatprep.subr.mxu0 %v149
    %286 = vmatpush1.msra.mxu0 %v148
    %287 = vmatprep.subr.mxu0 %v147
    %288 = vmatpush1.msra.mxu0 %v146
    %289 = vmatprep.subr.mxu0 %v145
    %290 = vmatpush1.msra.mxu0 %v144
    %291 = vmatprep.subr.mxu0 %v143
    %292 = vmatpush1.msra.mxu0 %v142
    %293 = vmatprep.subr.mxu0 %v141
    %294 = vmatpush1.msra.mxu0 %v140
    %295 = vmatprep.subr.mxu0 %v139
    %296 = vmatpush1.msra.mxu0 %v138
    %297 = vmatprep.subr.mxu0 %v137
    %298 = vmatpush1.msra.mxu0 %v136
    %299 = vmatprep.subr.mxu0 %v135
    %300 = vmatpush1.msra.mxu0 %v134
    %301 = vmatprep.subr.mxu0 %v133
    %302 = vmatpush1.msra.mxu0 %v132
    %303 = vmatprep.subr.mxu0 %v131
    %304 = vmatpush1.msra.mxu0 %v130
    %305 = vmatprep.subr.mxu0 %v129
    %306 = vmatpush1.msra.mxu0 %v128
    %307 = vmatprep.subr.mxu0 %v191
    %308 = vmatpush2.msra.mxu0 %v190
    %309 = vmatprep.subr.mxu0 %v189
    %310 = vmatpush2.msra.mxu0 %v188
    %311 = vmatprep.subr.mxu0 %v187
    %312 = vmatpush2.msra.mxu0 %v186
    %313 = vmatprep.subr.mxu0 %v185
    %314 = vmatpush2.msra.mxu0 %v184
    %315 = vmatprep.subr.mxu0 %v183
    %316 = vmatpush2.msra.mxu0 %v182
    %317 = vmatprep.subr.mxu0 %v181
    %318 = vmatpush2.msra.mxu0 %v180
    %319 = vmatprep.subr.mxu0 %v179
    %320 = vmatpush2.msra.mxu0 %v178
    %321 = vmatprep.subr.mxu0 %v177
    %322 = vmatpush2.msra.mxu0 %v176
    %323 = vmatprep.subr.mxu0 %v175
    %324 = vmatpush2.msra.mxu0 %v174
    %325 = vmatprep.subr.mxu0 %v173
    %326 = vmatpush2.msra.mxu0 %v172
    %327 = vmatprep.subr.mxu0 %v171
    %328 = vmatpush2.msra.mxu0 %v170
    %329 = vmatprep.subr.mxu0 %v169
    %330 = vmatpush2.msra.mxu0 %v168
    %331 = vmatprep.subr.mxu0 %v167
    %332 = vmatpush2.msra.mxu0 %v166
    %333 = vmatprep.subr.mxu0 %v165
    %334 = vmatpush2.msra.mxu0 %v164
    %335 = vmatprep.subr.mxu0 %v163
    %336 = vmatpush2.msra.mxu0 %v162
    %337 = vmatprep.subr.mxu0 %v161
    %338 = vmatpush2.msra.mxu0 %v160
    %339 = vmatprep.mubr.f32.mxu0 %v63
    %340 = vmatmul.mubr.f32.gmra.mxu0 %v62
    %v341 = vpop.f32.mrf.mxu0
    %v342 = vadd.f32 %v271, %v341
    %v343 = vpop.f32.mrf.mxu0
    %v344 = vadd.f32 %v273, %v343
    %345 = vdwg.mxu0
    %v346 = vmax.f32 %v342, 0.0
    %v347 = vmax.f32 %v344, 0.0
    %v348 = vld [vmem:[#allocation7] sm:$0xff]
    %v349 = vld [vmem:[#allocation7 + $0x8] sm:$0xff]
    %v350 = vld [vmem:[#allocation7 + $0x10] sm:$0xff]
    %v351 = vld [vmem:[#allocation7 + $0x18] sm:$0xff]
    %v352 = vld [vmem:[#allocation7 + $0x20] sm:$0xff]
    %v353 = vld [vmem:[#allocation7 + $0x28] sm:$0xff]
    %v354 = vld [vmem:[#allocation7 + $0x30] sm:$0xff]
    %v355 = vld [vmem:[#allocation7 + $0x38] sm:$0xff]
    %v356 = vld [vmem:[#allocation7 + $0x40] sm:$0xff]
    %v357 = vld [vmem:[#allocation7 + $0x48] sm:$0xff]
    %v358 = vld [vmem:[#allocation7 + $0x50] sm:$0xff]
    %v359 = vld [vmem:[#allocation7 + $0x58] sm:$0xff]
    %v360 = vld [vmem:[#allocation7 + $0x60] sm:$0xff]
    %v361 = vld [vmem:[#allocation7 + $0x68] sm:$0xff]
    %v362 = vld [vmem:[#allocation7 + $0x70] sm:$0xff]
    %v363 = vld [vmem:[#allocation7 + $0x78] sm:$0xff]
    %v364 = vld [vmem:[#allocation7 + $0x80] sm:$0xff]
    %v365 = vld [vmem:[#allocation7 + $0x88] sm:$0xff]
    %v366 = vld [vmem:[#allocation7 + $0x90] sm:$0xff]
    %v367 = vld [vmem:[#allocation7 + $0x98] sm:$0xff]
    %v368 = vld [vmem:[#allocation7 + $0xa0] sm:$0xff]
    %v369 = vld [vmem:[#allocation7 + $0xa8] sm:$0xff]
    %v370 = vld [vmem:[#allocation7 + $0xb0] sm:$0xff]
    %v371 = vld [vmem:[#allocation7 + $0xb8] sm:$0xff]
    %v372 = vld [vmem:[#allocation7 + $0xc0] sm:$0xff]
    %v373 = vld [vmem:[#allocation7 + $0xc8] sm:$0xff]
    %v374 = vld [vmem:[#allocation7 + $0xd0] sm:$0xff]
    %v375 = vld [vmem:[#allocation7 + $0xd8] sm:$0xff]
    %v376 = vld [vmem:[#allocation7 + $0xe0] sm:$0xff]
    %v377 = vld [vmem:[#allocation7 + $0xe8] sm:$0xff]
    %v378 = vld [vmem:[#allocation7 + $0xf0] sm:$0xff]
    %v379 = vld [vmem:[#allocation7 + $0xf8] sm:$0xff]
    %v380 = vld [vmem:[%s4] sm:$0x1]
    %v382 = vlaneseq
    %v383 = vshrl.u32 %v382, 7
    %v384 = vsub.s32 0, %v383
    %v385 = vrot.slane %v380, %v384
    %387 = vmatprep.subr.mxu0 0.0
    %388 = vmatpush1.msra.mxu0 %v363
    %389 = vmatprep.subr.mxu0 0.0
    %390 = vmatpush1.msra.mxu0 %v362
    %391 = vmatprep.subr.mxu0 0.0
    %392 = vmatpush1.msra.mxu0 %v361
    %393 = vmatprep.subr.mxu0 0.0
    %394 = vmatpush1.msra.mxu0 %v360
    %395 = vmatprep.subr.mxu0 0.0
    %396 = vmatpush1.msra.mxu0 %v359
    %397 = vmatprep.subr.mxu0 0.0
    %398 = vmatpush1.msra.mxu0 %v358
    %399 = vmatprep.subr.mxu0 0.0
    %400 = vmatpush1.msra.mxu0 %v357
    %401 = vmatprep.subr.mxu0 0.0
    %402 = vmatpush1.msra.mxu0 %v356
    %403 = vmatprep.subr.mxu0 0.0
    %404 = vmatpush1.msra.mxu0 %v355
    %405 = vmatprep.subr.mxu0 0.0
    %406 = vmatpush1.msra.mxu0 %v354
    %407 = vmatprep.subr.mxu0 0.0
    %408 = vmatpush1.msra.mxu0 %v353
    %409 = vmatprep.subr.mxu0 0.0
    %410 = vmatpush1.msra.mxu0 %v352
    %411 = vmatprep.subr.mxu0 0.0
    %412 = vmatpush1.msra.mxu0 %v351
    %413 = vmatprep.subr.mxu0 0.0
    %414 = vmatpush1.msra.mxu0 %v350
    %415 = vmatprep.subr.mxu0 0.0
    %416 = vmatpush1.msra.mxu0 %v349
    %417 = vmatprep.subr.mxu0 0.0
    %418 = vmatpush1.msra.mxu0 %v348
    %419 = vmatprep.subr.mxu0 0.0
    %420 = vmatpush2.msra.mxu0 %v379
    %421 = vmatprep.subr.mxu0 0.0
    %422 = vmatpush2.msra.mxu0 %v378
    %423 = vmatprep.subr.mxu0 0.0
    %424 = vmatpush2.msra.mxu0 %v377
    %425 = vmatprep.subr.mxu0 0.0
    %426 = vmatpush2.msra.mxu0 %v376
    %427 = vmatprep.subr.mxu0 0.0
    %428 = vmatpush2.msra.mxu0 %v375
    %429 = vmatprep.subr.mxu0 0.0
    %430 = vmatpush2.msra.mxu0 %v374
    %431 = vmatprep.subr.mxu0 0.0
    %432 = vmatpush2.msra.mxu0 %v373
    %433 = vmatprep.subr.mxu0 0.0
    %434 = vmatpush2.msra.mxu0 %v372
    %435 = vmatprep.subr.mxu0 0.0
    %436 = vmatpush2.msra.mxu0 %v371
    %437 = vmatprep.subr.mxu0 0.0
    %438 = vmatpush2.msra.mxu0 %v370
    %439 = vmatprep.subr.mxu0 0.0
    %440 = vmatpush2.msra.mxu0 %v369
    %441 = vmatprep.subr.mxu0 0.0
    %442 = vmatpush2.msra.mxu0 %v368
    %443 = vmatprep.subr.mxu0 0.0
    %444 = vmatpush2.msra.mxu0 %v367
    %445 = vmatprep.subr.mxu0 0.0
    %446 = vmatpush2.msra.mxu0 %v366
    %447 = vmatprep.subr.mxu0 0.0
    %448 = vmatpush2.msra.mxu0 %v365
    %449 = vmatprep.subr.mxu0 0.0
    %450 = vmatpush2.msra.mxu0 %v364
    %451 = vmatprep.mubr.f32.mxu0 %v347
    %452 = vmatmul.mubr.f32.gmra.mxu0 %v346
    %v453 = vpop.f32.mrf.mxu0
    %v454 = vadd.f32 %v385, %v453
    %v455 = vpop.f32.mrf.mxu0
    %456 = vdwg.mxu0
    %457 = vst [vmem:[#allocation8] sm:$0xff] %v454
    // Predicated region
    $region34: #{projector_forward.1} parent=1 // pred_check
      _
    $region35: #{projector_forward.1} parent=1 // pred_check_branch
      %459 = sbr.rel (0) target = $region37
    $region36: #{projector_forward.1} parent=1 // pred_region
      %s461 = ssub.s32 128, 128
      %462 = vsyncadd [#allocation4], %s461
      %s464 = sshll.u32 [#allocation8], 4
      %s465 = int_to_ptr.vmem [resolvable:$true] %s464
      %467 = dma.vmem_to_hbm [thread:$0]  %s465, 128, %s5, [#allocation4]
    $region37: #{projector_forward.1} parent=1 // pred_fallthru
      _
    // Predicated region
    $region38: #{projector_forward.1} parent=1 // pred_check
      _
    $region39: #{projector_forward.1} parent=1 // pred_check_branch
      %469 = sbr.rel (0) target = $region41
    $region40: #{projector_forward.1} parent=1 // pred_region
      %470 = dma.done [#allocation4], 128
    $region41: #{projector_forward.1} parent=1 // pred_fallthru
      _
    %471 = vsyncpa [#allocation3], 1
    %472 = vsyncpa [#allocation6], 1
    %473 = vsyncpa [#allocation4], 1

</llo_original>
